<compile_context>
chip_gen: v7x
topology: tpu7x:2x2x1
jax: 0.10.0
libtpu: 0.0.40
codegen_flags: <defaults>
</compile_context>

<pallas_src>
import jax
import jax.numpy as jnp
from jax import lax
from jax.experimental import pallas as pl
from jax.experimental.pallas import tpu as pltpu


def _round_up(a: int, b: int) -> int:
    return ((a + b - 1) // b) * b


def _round_down(a: int, b: int) -> int:
    return (a // b) * b


def _frozen_bn_kernel(x_ref, scale_ref, bias_ref, o_ref):
    # x_ref:     (TR, TC)  input dtype
    # scale_ref: (TR, 1)   float32
    # bias_ref:  (TR, 1)   float32
    x = x_ref[...]
    s = scale_ref[...].astype(x.dtype)   # single-vreg cast; keeps bf16 math bf16
    b = bias_ref[...].astype(x.dtype)
    o_ref[...] = (x * s + b).astype(o_ref.dtype)


def frozen_batch_norm_2d(x, weight, bias, running_mean, running_var, eps=1e-05):
    """x: (N, C, H, W); weight/bias/running_mean/running_var: (C,)."""
    N, C, H, W = x.shape
    R, L = N * C, H * W

    # Fold the four frozen buffers into per-channel (scale, bias) in float32
    # (matches PyTorch: scale = w * rsqrt(rv + eps), bias = b - rm * scale).
    w32 = weight.astype(jnp.float32)
    b32 = bias.astype(jnp.float32)
    rm32 = running_mean.astype(jnp.float32)
    rv32 = running_var.astype(jnp.float32)
    scale_c = w32 * lax.rsqrt(rv32 + eps)        # (C,)
    bias_c = b32 - rm32 * scale_c                # (C,)

    # One row per (n, c) plane; per-row params broadcast across the lane dim.
    scale_r = jnp.broadcast_to(scale_c[None, :], (N, C)).reshape(R, 1)
    bias_r = jnp.broadcast_to(bias_c[None, :], (N, C)).reshape(R, 1)
    x2d = x.reshape(R, L)

    if L < 128:
        # Lane-sparse output (< one full lane per plane): masked partial vst
        # would dominate; plain XLA is the right tool for tiny feature maps.
        out = x2d.astype(jnp.float32) * scale_r + bias_r
        return out.astype(x.dtype).reshape(N, C, H, W)

    itemsize = jnp.dtype(x.dtype).itemsize
    sublane = 32 if itemsize == 1 else (16 if itemsize == 2 else 8)

    # --- Tile selection: ~6 MiB of x per block.  Prefer full contiguous rows
    # --- (TC = L) when at least `sublane` of them fit the budget; cap TR so
    # --- the (TR,128)-padded f32 param buffers stay small.
    target_bytes = 6 << 20
    tr_cap = 4096
    row_bytes = L * itemsize
    if sublane * row_bytes <= target_bytes:
        TC = L                                   # full contiguous rows per block
        max_rows = _round_down(target_bytes // row_bytes, sublane)
        TR = min(tr_cap, max_rows, _round_up(R, sublane))
    else:
        TR = sublane                             # huge rows: lane-dense chunks
        TC = _round_down(target_bytes // (sublane * itemsize), 128)

    # v7x has 2 TensorCores sharing HBM: make sure the sharded row axis has at
    # least 2 blocks whenever the data allows it (no effect on v5e/v6e).
    if pl.cdiv(R, TR) < 2 and R > sublane:
        TR = max(sublane, _round_up(pl.cdiv(R, 2), sublane))

    grid = (pl.cdiv(R, TR), pl.cdiv(L, TC))

    # VMEM budget: double-buffered x in/out blocks + double-buffered param
    # blocks (each (TR,1) f32 pads to (TR,128) in VMEM) + compiler headroom,
    # capped safely below v7x's 64 MiB/TC.
    block_bytes = TR * TC * itemsize
    param_bytes = 4 * TR * 128 * 4
    vmem_limit = int(min(4 * block_bytes + param_bytes + (8 << 20), 48 << 20))

    out2d = pl.pallas_call(
        _frozen_bn_kernel,
        out_shape=jax.ShapeDtypeStruct((R, L), x.dtype),
        grid=grid,
        in_specs=[
            pl.BlockSpec((TR, TC), lambda i, j: (i, j)),
            pl.BlockSpec((TR, 1), lambda i, j: (i, 0)),
            pl.BlockSpec((TR, 1), lambda i, j: (i, 0)),
        ],
        out_specs=pl.BlockSpec((TR, TC), lambda i, j: (i, j)),
        compiler_params=pltpu.CompilerParams(
            dimension_semantics=("parallel", "parallel"),
            vmem_limit_bytes=vmem_limit,
        ),
        cost_estimate=pl.CostEstimate(
            flops=2 * R * L,
            bytes_accessed=2 * R * L * itemsize + 2 * R * 4,
            transcendentals=0,
        ),
    )(x2d, scale_r, bias_r)

    return out2d.reshape(N, C, H, W)


if __name__ == "__main__":
    key = jax.random.PRNGKey(0)
    N, C, H, W = 2, 4, 16, 16

    kx, kw, kb, km, kv = jax.random.split(key, 5)
    x = jax.random.normal(kx, (N, C, H, W), dtype=jnp.float32)

    # Deterministic "frozen" buffers (module defaults are ones/zeros; perturb
    # them deterministically so the affine transform is non-trivial).
    weight = jnp.ones((C,), jnp.float32) + 0.1 * jax.random.normal(kw, (C,))
    bias = jnp.zeros((C,), jnp.float32) + 0.1 * jax.random.normal(kb, (C,))
    running_mean = 0.1 * jax.random.normal(km, (C,))
    running_var = jnp.ones((C,), jnp.float32) + 0.05 * jnp.abs(
        jax.random.normal(kv, (C,))
    )

    out = frozen_batch_norm_2d(x, weight, bias, running_mean, running_var)
    out = jax.block_until_ready(out)

    # Reference (plain JAX, mirrors the PyTorch forward exactly).
    eps = 1e-05
    scale = (weight * lax.rsqrt(running_var + eps)).reshape(1, C, 1, 1)
    ref = x * scale + (
        bias.reshape(1, C, 1, 1) - running_mean.reshape(1, C, 1, 1) * scale
    )

    assert out.shape == (N, C, H, W)
    assert jnp.allclose(out, ref, atol=1e-5, rtol=1e-5)
    print("KERNEL_OK")
</pallas_src>

<mosaic_0001>
module attributes {stable_mosaic.version = 11 : i64} {
  func.func @_frozen_bn_kernel(%arg0: i32, %arg1: i32, %arg2: memref<8x256xf32, #tpu.memory_space<vmem>>, %arg3: memref<8x1xf32, #tpu.memory_space<vmem>>, %arg4: memref<8x1xf32, #tpu.memory_space<vmem>>, %arg5: memref<8x256xf32, #tpu.memory_space<vmem>>) attributes {dimension_semantics = [#tpu.dimension_semantics<parallel>, #tpu.dimension_semantics<parallel>], iteration_bounds = array<i64: 1, 1>, scalar_prefetch = 0 : i64, scratch_operands = 0 : i64, tpu.core_type = #tpu.core_type<tc>, window_params = [{transform_indices = @transform_0, window_bounds = array<i64: 8, 256>}, {transform_indices = @transform_1, window_bounds = array<i64: 8, 1>}, {transform_indices = @transform_2, window_bounds = array<i64: 8, 1>}, {transform_indices = @transform_3, window_bounds = array<i64: 8, 256>}]} {
    %c0 = arith.constant 0 : index
    %c0_0 = arith.constant 0 : index
    %0 = vector.load %arg2[%c0, %c0_0] : memref<8x256xf32, #tpu.memory_space<vmem>>, vector<8x256xf32>
    %c0_1 = arith.constant 0 : index
    %c0_2 = arith.constant 0 : index
    %1 = vector.load %arg3[%c0_1, %c0_2] : memref<8x1xf32, #tpu.memory_space<vmem>>, vector<8x1xf32>
    %c0_3 = arith.constant 0 : index
    %c0_4 = arith.constant 0 : index
    %2 = vector.load %arg4[%c0_3, %c0_4] : memref<8x1xf32, #tpu.memory_space<vmem>>, vector<8x1xf32>
    %3 = vector.broadcast %1 : vector<8x1xf32> to vector<8x256xf32>
    %4 = arith.mulf %0, %3 : vector<8x256xf32>
    %5 = vector.broadcast %2 : vector<8x1xf32> to vector<8x256xf32>
    %6 = arith.addf %4, %5 : vector<8x256xf32>
    %c0_5 = arith.constant 0 : index
    %c0_6 = arith.constant 0 : index
    %7 = vector.load %arg5[%c0_5, %c0_6] : memref<8x256xf32, #tpu.memory_space<vmem>>, vector<8x256xf32>
    tpu.vector_store %arg5[%c0_5, %c0_6], %6 {strides = array<i32>} : memref<8x256xf32, #tpu.memory_space<vmem>>, vector<8x256xf32>,
    return
  }
  func.func @transform_0(%arg0: i32, %arg1: i32) -> (i32, i32) {
    %c0_i32 = arith.constant 0 : i32
    return %arg0, %arg1 : i32, i32
  }
  func.func @transform_1(%arg0: i32, %arg1: i32) -> (i32, i32) {
    %c0_i32 = arith.constant 0 : i32
    %c0_i32_0 = arith.constant 0 : i32
    return %arg0, %c0_i32 : i32, i32
  }
  func.func @transform_2(%arg0: i32, %arg1: i32) -> (i32, i32) {
    %c0_i32 = arith.constant 0 : i32
    %c0_i32_0 = arith.constant 0 : i32
    return %arg0, %c0_i32 : i32, i32
  }
  func.func @transform_3(%arg0: i32, %arg1: i32) -> (i32, i32) {
    %c0_i32 = arith.constant 0 : i32
    return %arg0, %arg1 : i32, i32
  }
}

</mosaic_0001>

<llo_original>
// kernel: tpu_custom_call.1
$region0: #{tpu_custom_call.1}
  #allocation0 [shape = 'u32[]', space=smem, size = 0x4, offset = 0x4, fixed_abs, tag = 'smem constant byte address 0x4 - core index']
  #allocation1 [shape = 'u32[144,128]{1,0:T(1,128)}', space=vmem, size = 0x12000, scoped, tag = 'internal scratch']
  %s0 = inlined_call_operand.vmem [shape: f32[8,256], index: 0, kind: input, shape index: {}]
  %s1 = inlined_call_operand.vmem [shape: f32[8,1], index: 1, kind: input, shape index: {}]
  %s2 = inlined_call_operand.vmem [shape: f32[8,1], index: 2, kind: input, shape index: {}]
  %s3 = inlined_call_operand.hbm [shape: f32[8,256], index: 3, kind: output, shape index: {}]
  %s4 = sld [smem:[#allocation0]]
  $region22: #{tpu_custom_call.1} parent=0
    _
  %s6 = ssub.s32 1, %s4
  %s7 = scalar_select 0, %s6, %s4
  $region1: #{tpu_custom_call.1} parent=0
    #allocation2 [shape = 'u8[8192]{0}', space=vmem, size = 0x2000, scoped, tag = 'output window, operand 0, single buffered']
    #allocation3 [shape = 's32[1]{0}', space=sflag, size = 0x4, scoped, tag = 'scoped memory for tpu_custom_call.1']
    %8 = vsyncpa [#allocation3], 0
    // Predicated region
    $region2: #{tpu_custom_call.1} parent=1 // pred_check
      _
    $region3: #{tpu_custom_call.1} parent=1 // pred_check_branch
      %10 = sbr.rel (0) target = $region5
    $region4: #{tpu_custom_call.1} parent=1 // pred_region
      _
    $region5: #{tpu_custom_call.1} parent=1 // pred_fallthru
      _
    // Predicated region
    $region6: #{tpu_custom_call.1} parent=1 // pred_check
      _
    $region7: #{tpu_custom_call.1} parent=1 // pred_check_branch
      %12 = sbr.rel (0) target = $region9
    $region8: #{tpu_custom_call.1} parent=1 // pred_region
      _
    $region9: #{tpu_custom_call.1} parent=1 // pred_fallthru
      _
    // Predicated region
    $region10: #{tpu_custom_call.1} parent=1 // pred_check
      _
    $region11: #{tpu_custom_call.1} parent=1 // pred_check_branch
      %14 = sbr.rel (0) target = $region13
    $region12: #{tpu_custom_call.1} parent=1 // pred_region
      _
    $region13: #{tpu_custom_call.1} parent=1 // pred_fallthru
      _
    %v15 = vld [vmem:[%s0] sm:$0xff]
    %v16 = vld [vmem:[%s0 + $0x8] sm:$0xff]
    %v17 = vld [vmem:[%s1] sm:$0xff]
    %v18 = vld [vmem:[%s2] sm:$0xff]
    %20 = vset.pattern.permute.xlu0 0
    %21 = vperm.xlu0 %20, %v17
    %v22 = vpop.permute.xlu0 %21
    %v24 = vmul.f32 %v15, %v22
    %v25 = vmul.f32 %v16, %v22
    %27 = vset.pattern.permute.xlu0 0
    %28 = vperm.xlu0 %27, %v18
    %v29 = vpop.permute.xlu0 %28
    %v31 = vadd.f32 %v24, %v29
    %v32 = vadd.f32 %v25, %v29
    %33 = vst [vmem:[#allocation2] sm:$0xff] %v31
    %34 = vst [vmem:[#allocation2 + $0x8] sm:$0xff] %v32
    // Predicated region
    $region14: #{tpu_custom_call.1} parent=1 // pred_check
      _
    $region15: #{tpu_custom_call.1} parent=1 // pred_check_branch
      %36 = sbr.rel (0) target = $region17
    $region16: #{tpu_custom_call.1} parent=1 // pred_region
      %s38 = ssub.s32 256, 256
      %39 = vsyncadd [#allocation3], %s38
      %s41 = sshll.u32 [#allocation2], 4
      %s42 = int_to_ptr.vmem [resolvable:$true] %s41
      %44 = dma.vmem_to_hbm [thread:$0]  %s42, 256, %s3, [#allocation3]
    $region17: #{tpu_custom_call.1} parent=1 // pred_fallthru
      _
    // Predicated region
    $region18: #{tpu_custom_call.1} parent=1 // pred_check
      _
    $region19: #{tpu_custom_call.1} parent=1 // pred_check_branch
      %46 = sbr.rel (0) target = $region21
    $region20: #{tpu_custom_call.1} parent=1 // pred_region
      %47 = dma.done [#allocation3], 256
    $region21: #{tpu_custom_call.1} parent=1 // pred_fallthru
      _
    %48 = vsyncpa [#allocation3], 1

</llo_original>
